<compile_context>
chip_gen: v7x
topology: tpu7x:2x2x1
jax: 0.10.0
libtpu: 0.0.40
codegen_flags: <defaults>
</compile_context>

<pallas_src>
import functools

import jax
import jax.numpy as jnp
from jax.experimental import pallas as pl
from jax.experimental.pallas import tpu as pltpu


def _gather_rows(ids_smem, table_hbm, dst_buf, sem, base, tm):
    """DMA-gather tm embedding rows (ids from SMEM) from HBM into dst_buf."""

    # Issue all row copies first so the DMA engine pipelines them ...
    @pl.loop(0, tm)
    def _start(r):
        idx = ids_smem[base + r]
        pltpu.make_async_copy(
            table_hbm.at[pl.ds(idx, 1), :],
            dst_buf.at[pl.ds(r, 1), :],
            sem,
        ).start()

    # ... then drain the shared semaphore one row at a time.
    @pl.loop(0, tm)
    def _wait(r):
        pltpu.make_async_copy(
            table_hbm.at[pl.ds(0, 1), :],
            dst_buf.at[pl.ds(r, 1), :],
            sem,
        ).wait()


def _embed_project_kernel(ids_smem, table_hbm, w_ref, b_ref, out_ref,
                          emb_buf, sem):
    tm = out_ref.shape[0]
    base = pl.program_id(0) * tm
    _gather_rows(ids_smem, table_hbm, emb_buf, sem, base, tm)
    out = jnp.dot(emb_buf[...], w_ref[...],
                  preferred_element_type=jnp.float32)
    out = out + b_ref[...]
    out_ref[...] = out.astype(out_ref.dtype)


def _embed_kernel(ids_smem, table_hbm, out_ref, emb_buf, sem):
    tm = out_ref.shape[0]
    base = pl.program_id(0) * tm
    _gather_rows(ids_smem, table_hbm, emb_buf, sem, base, tm)
    out_ref[...] = emb_buf[...]


@functools.partial(jax.jit, static_argnames=("tm",))
def glove_embedding_forward(ids, table, w=None, b=None, *, tm=128):
    """ids: (B, S) int32. Returns (B, S, H) if w is given else (B, S, E)."""
    B, S = ids.shape
    V, E = table.shape
    N = B * S

    # Tile size: multiple of 8 rows, but no larger than the rounded-up token
    # count so tiny inputs are not massively over-padded.
    tm_eff = max(8, min(int(tm), ((N + 7) // 8) * 8))
    tm_eff = ((tm_eff + 7) // 8) * 8
    n_tiles = (N + tm_eff - 1) // tm_eff
    n_pad = n_tiles * tm_eff

    # TODO(synk): PyTorch nn.Embedding raises on out-of-range ids; we clamp so
    # a bad id can never cause an out-of-bounds HBM DMA.
    ids_flat = jnp.clip(ids.reshape(-1).astype(jnp.int32), 0, V - 1)
    if n_pad != N:
        ids_flat = jnp.pad(ids_flat, (0, n_pad - N))

    grid = (n_tiles,)
    table_spec = pl.BlockSpec(memory_space=pl.ANY)   # table stays in HBM

    if w is not None:
        H = w.shape[1]
        out = pl.pallas_call(
            _embed_project_kernel,
            out_shape=jax.ShapeDtypeStruct((n_pad, H), jnp.float32),
            grid_spec=pltpu.PrefetchScalarGridSpec(
                num_scalar_prefetch=1,
                grid=grid,
                in_specs=[
                    table_spec,
                    pl.BlockSpec((E, H), lambda i, ids: (0, 0)),
                    pl.BlockSpec((1, H), lambda i, ids: (0, 0)),
                ],
                out_specs=pl.BlockSpec((tm_eff, H), lambda i, ids: (i, 0)),
                scratch_shapes=[
                    pltpu.VMEM((tm_eff, E), table.dtype),
                    pltpu.SemaphoreType.DMA(()),
                ],
            ),
            compiler_params=pltpu.CompilerParams(
                dimension_semantics=("parallel",)),
        )(ids_flat, table, w, b)
        return out[:N].reshape(B, S, H)

    out = pl.pallas_call(
        _embed_kernel,
        out_shape=jax.ShapeDtypeStruct((n_pad, E), jnp.float32),
        grid_spec=pltpu.PrefetchScalarGridSpec(
            num_scalar_prefetch=1,
            grid=grid,
            in_specs=[table_spec],
            out_specs=pl.BlockSpec((tm_eff, E), lambda i, ids: (i, 0)),
            scratch_shapes=[
                pltpu.VMEM((tm_eff, E), table.dtype),
                pltpu.SemaphoreType.DMA(()),
            ],
        ),
        compiler_params=pltpu.CompilerParams(
            dimension_semantics=("parallel",)),
    )(ids_flat, table)
    return out[:N].reshape(B, S, E)


if __name__ == "__main__":
    # Small deterministic configuration consistent with the module.
    vocab_size, emb_dim, hid_dim = 512, 128, 128
    batch, seq = 2, 9   # N = 18: exercises the tail-padding path

    key = jax.random.PRNGKey(0)
    k_tab, k_w, k_b, k_ids = jax.random.split(key, 4)

    # nn.Embedding default init: N(0, 1)
    table = jax.random.normal(k_tab, (vocab_size, emb_dim), dtype=jnp.float32)
    # nn.Linear default init: U(-1/sqrt(in), 1/sqrt(in)); store W transposed (E, H)
    bound = 1.0 / (emb_dim ** 0.5)
    w = jax.random.uniform(k_w, (emb_dim, hid_dim), minval=-bound, maxval=bound,
                           dtype=jnp.float32)
    b = jax.random.uniform(k_b, (1, hid_dim), minval=-bound, maxval=bound,
                           dtype=jnp.float32)

    ids = jax.random.randint(k_ids, (batch, seq), 0, vocab_size, dtype=jnp.int32)

    # Plain-JAX reference of the PyTorch forward.
    ref = jnp.take(table, ids, axis=0) @ w + b            # (B, S, H)

    # Single-tile path (tm clamped to the padded token count).
    out = jax.block_until_ready(glove_embedding_forward(ids, table, w, b))
    assert out.shape == (batch, seq, hid_dim)
    assert jnp.allclose(out, ref, atol=1e-4, rtol=1e-4)

    # Multi-step grid path (several token tiles + padded tail).
    out_tiled = jax.block_until_ready(
        glove_embedding_forward(ids, table, w, b, tm=8))
    assert jnp.allclose(out_tiled, ref, atol=1e-4, rtol=1e-4)

    # hid_dim=None path: pure embedding lookup (gather only).
    out_no_proj = jax.block_until_ready(glove_embedding_forward(ids, table))
    assert jnp.allclose(out_no_proj, jnp.take(table, ids, axis=0),
                        atol=1e-5, rtol=1e-5)

    print("KERNEL_OK")
</pallas_src>

<mosaic_0001>
module attributes {stable_mosaic.version = 11 : i64} {
  func.func @_embed_project_kernel(%arg0: i32, %arg1: memref<24xi32, #tpu.memory_space<smem>>, %arg2: memref<512x128xf32, #tpu.memory_space<any>>, %arg3: memref<128x128xf32, #tpu.memory_space<vmem>>, %arg4: memref<1x128xf32, #tpu.memory_space<vmem>>, %arg5: memref<24x128xf32, #tpu.memory_space<vmem>>, %arg6: memref<24x128xf32, #tpu.memory_space<vmem>>, %arg7: memref<!tpu.dma_semaphore, #tpu.memory_space<semaphore_mem>>) attributes {dimension_semantics = [#tpu.dimension_semantics<parallel>], iteration_bounds = array<i64: 1>, scalar_prefetch = 1 : i64, scratch_operands = 2 : i64, tpu.core_type = #tpu.core_type<tc>, window_params = [{}, {pipeline_mode = #tpu.pipeline_mode<synchronous>, transform_indices = @transform_1, window_bounds = array<i64: 128, 128>}, {pipeline_mode = #tpu.pipeline_mode<synchronous>, transform_indices = @transform_2, window_bounds = array<i64: 1, 128>}, {transform_indices = @transform_3, window_bounds = array<i64: 24, 128>}]} {
    %c24_i32 = arith.constant 24 : i32
    %0 = arith.muli %arg0, %c24_i32 : i32
    %c0_i32 = arith.constant 0 : i32
    %c24_i32_0 = arith.constant 24 : i32
    %1 = arith.addi %c0_i32, %c24_i32_0 : i32
    %c1_i32 = arith.constant 1 : i32
    scf.for %arg8 = %c0_i32 to %1 step %c1_i32  : i32 {
      %c1_i32_13 = arith.constant 1 : i32
      %10 = arith.muli %arg8, %c1_i32_13 : i32
      %c0_i32_14 = arith.constant 0 : i32
      %11 = arith.addi %c0_i32_14, %10 : i32
      %12 = arith.addi %0, %11 : i32
      %13 = arith.index_cast %12 : i32 to index
      %14 = memref.load %arg1[%13] : memref<24xi32, #tpu.memory_space<smem>>
      %c0_i32_15 = arith.constant 0 : i32
      %15 = tpu.memref_slice %arg2[%14, %c0_i32_15] : memref<512x128xf32, #tpu.memory_space<any>> -> memref<1x128xf32, #tpu.memory_space<any>>
      %c0_i32_16 = arith.constant 0 : i32
      %16 = tpu.memref_slice %arg6[%11, %c0_i32_16] : memref<24x128xf32, #tpu.memory_space<vmem>> -> memref<1x128xf32, #tpu.memory_space<vmem>>
      tpu.enqueue_dma source(%15 : memref<1x128xf32, #tpu.memory_space<any>>) target(%16 : memref<1x128xf32, #tpu.memory_space<vmem>>) target_semaphore(%arg7 : memref<!tpu.dma_semaphore, #tpu.memory_space<semaphore_mem>>)
    }
    %c24_i32_1 = arith.constant 24 : i32
    %c0_i32_2 = arith.constant 0 : i32
    %c24_i32_3 = arith.constant 24 : i32
    %2 = arith.addi %c0_i32_2, %c24_i32_3 : i32
    %c1_i32_4 = arith.constant 1 : i32
    scf.for %arg8 = %c0_i32_2 to %2 step %c1_i32_4  : i32 {
      %c1_i32_13 = arith.constant 1 : i32
      %10 = arith.muli %arg8, %c1_i32_13 : i32
      %c0_i32_14 = arith.constant 0 : i32
      %11 = arith.addi %c0_i32_14, %10 : i32
      %c0_i32_15 = arith.constant 0 : i32
      %c0_i32_16 = arith.constant 0 : i32
      %12 = tpu.memref_slice %arg2[%c0_i32_15, %c0_i32_16] : memref<512x128xf32, #tpu.memory_space<any>> -> memref<1x128xf32, #tpu.memory_space<any>>
      %c0_i32_17 = arith.constant 0 : i32
      %13 = tpu.memref_slice %arg6[%11, %c0_i32_17] : memref<24x128xf32, #tpu.memory_space<vmem>> -> memref<1x128xf32, #tpu.memory_space<vmem>>
      tpu.wait_dma2 semaphore(%arg7 : memref<!tpu.dma_semaphore, #tpu.memory_space<semaphore_mem>>) src(%12 : memref<1x128xf32, #tpu.memory_space<any>>) dst(%13 : memref<1x128xf32, #tpu.memory_space<vmem>>)
    }
    %c24_i32_5 = arith.constant 24 : i32
    %c0 = arith.constant 0 : index
    %c0_6 = arith.constant 0 : index
    %3 = vector.load %arg6[%c0, %c0_6] : memref<24x128xf32, #tpu.memory_space<vmem>>, vector<24x128xf32>
    %c0_7 = arith.constant 0 : index
    %c0_8 = arith.constant 0 : index
    %4 = vector.load %arg3[%c0_7, %c0_8] : memref<128x128xf32, #tpu.memory_space<vmem>>, vector<128x128xf32>
    %cst = arith.constant dense<0.000000e+00> : vector<24x128xf32>
    %5 = tpu.matmul %3, %4, %cst {dimension_numbers = #tpu.dot_dimension_numbers<[1], [0], [0], [1], [0, 0, 1, 1], [], []>} : vector<24x128xf32>, vector<128x128xf32>, vector<24x128xf32> -> vector<24x128xf32>
    %c0_9 = arith.constant 0 : index
    %c0_10 = arith.constant 0 : index
    %6 = vector.load %arg4[%c0_9, %c0_10] : memref<1x128xf32, #tpu.memory_space<vmem>>, vector<1x128xf32>
    %7 = vector.broadcast %6 : vector<1x128xf32> to vector<24x128xf32>
    %8 = arith.addf %5, %7 : vector<24x128xf32>
    %c0_11 = arith.constant 0 : index
    %c0_12 = arith.constant 0 : index
    %9 = vector.load %arg5[%c0_11, %c0_12] : memref<24x128xf32, #tpu.memory_space<vmem>>, vector<24x128xf32>
    tpu.vector_store %arg5[%c0_11, %c0_12], %8 {strides = array<i32>} : memref<24x128xf32, #tpu.memory_space<vmem>>, vector<24x128xf32>,
    return
  }
  func.func @transform_1(%arg0: i32, %arg1: memref<24xi32, #tpu.memory_space<smem>>) -> (i32, i32) {
    %c0_i32 = arith.constant 0 : i32
    %c0_i32_0 = arith.constant 0 : i32
    %c0_i32_1 = arith.constant 0 : i32
    return %c0_i32, %c0_i32_0 : i32, i32
  }
  func.func @transform_2(%arg0: i32, %arg1: memref<24xi32, #tpu.memory_space<smem>>) -> (i32, i32) {
    %c0_i32 = arith.constant 0 : i32
    %c0_i32_0 = arith.constant 0 : i32
    %c0_i32_1 = arith.constant 0 : i32
    return %c0_i32, %c0_i32_0 : i32, i32
  }
  func.func @transform_3(%arg0: i32, %arg1: memref<24xi32, #tpu.memory_space<smem>>) -> (i32, i32) {
    %c0_i32 = arith.constant 0 : i32
    %c0_i32_0 = arith.constant 0 : i32
    return %arg0, %c0_i32 : i32, i32
  }
}

</mosaic_0001>

<llo_original>
// kernel: glove_embedding_forward.1
$region0: #{glove_embedding_forward.1}
  #allocation0 [shape = 'u32[]', space=smem, size = 0x4, offset = 0x4, fixed_abs, tag = 'smem constant byte address 0x4 - core index']
  #allocation1 [shape = 'u32[144,128]{1,0:T(1,128)}', space=vmem, size = 0x12000, scoped, tag = 'internal scratch']
  #allocation2 [shape = 'f32[24,128]{1,0:T(8,128)}', space=vmem, size = 0x3000, scoped, tag = 'scratch operand']
  #allocation3 [shape = 's32[1]{0}', space=sflag, size = 0x4, scoped, tag = 'scratch operand']
  #allocation4 [shape = 's32[1]{0}', space=sflag, size = 0x4, scoped, tag = 'scoped memory for glove_embedding_forward.1']
  #allocation5 [shape = 'u8[512]{0}', space=smem, size = 0x200, scoped, tag = 'prefetched SMEM operand 0']
  #allocation8 [shape = 's32[]', space=sflag, size = 0x4, offset = 0, fixed_abs, tag = 'sflag constant byte address 0x0 - dummy sync flag']
  #allocation9 [shape = 's32[]', space=sflag, size = 0x4, offset = 0, fixed_abs, tag = 'sflag constant byte address 0x0 - dummy sync flag']
  #allocation10 [shape = 'u32[]', space=smem, size = 0x4, offset = 0x44, fixed_abs, tag = 'smem constant byte address 0x44 - assertion arg 0']
  #allocation11 [shape = 'u32[]', space=smem, size = 0x4, offset = 0x48, fixed_abs, tag = 'smem constant byte address 0x48 - assertion arg 1']
  %s0 = inlined_call_operand.vmem [shape: s32[24], index: 0, kind: input, shape index: {}]
  %s1 = inlined_call_operand.hbm [shape: f32[512,128], index: 1, kind: input, shape index: {}]
  %s2 = inlined_call_operand.hbm [shape: f32[128,128], index: 2, kind: input, shape index: {}]
  %s3 = inlined_call_operand.vmem [shape: f32[1,128], index: 3, kind: input, shape index: {}]
  %s4 = inlined_call_operand.vmem [shape: f32[24,128], index: 4, kind: output, shape index: {}]
  %s5 = sld [smem:[#allocation0]]
  $region40: #{glove_embedding_forward.1} parent=0
    _
  %s7 = ssub.s32 1, %s5
  %s8 = scalar_select 0, %s7, %s5
  %s9 = sshll.u32 %s0, 4
  %s10 = int_to_ptr.vmem [resolvable:$true] %s9
  %12 = dma.vmem_to_smem %s10, 16, [#allocation5], [#allocation4]
  %13 = dma.done [#allocation4], 16
  %14 = sfence
  $region1: #{glove_embedding_forward.1} parent=0
    #allocation6 [shape = 'u8[65536]{0}', space=vmem, size = 0x10000, scoped, tag = 'input window, operand 2, single buffered']
    #allocation7 [shape = 's32[1]{0}', space=sflag, size = 0x4, scoped, tag = 'scoped memory for glove_embedding_forward.1']
    %15 = vsyncpa [#allocation7], 0
    // Predicated region
    $region2: #{glove_embedding_forward.1} parent=1 // pred_check
      _
    $region3: #{glove_embedding_forward.1} parent=1 // pred_check_branch
      %17 = sbr.rel (0) target = $region5
    $region4: #{glove_embedding_forward.1} parent=1 // pred_region
      %s19 = ssub.s32 2048, 2048
      %20 = vsyncadd [#allocation7], %s19
      %s21 = sshll.u32 [#allocation6], 4
      %s22 = int_to_ptr.vmem [resolvable:$true] %s21
      %27 = dma.hbm_to_vmem [thread:$0]  %s2, 2048, %s22, [#allocation7], 128, 128, 8
    $region5: #{glove_embedding_forward.1} parent=1 // pred_fallthru
      _
    // Predicated region
    $region6: #{glove_embedding_forward.1} parent=1 // pred_check
      _
    $region7: #{glove_embedding_forward.1} parent=1 // pred_check_branch
      %29 = sbr.rel (0) target = $region9
    $region8: #{glove_embedding_forward.1} parent=1 // pred_region
      _
    $region9: #{glove_embedding_forward.1} parent=1 // pred_fallthru
      _
    // Predicated region
    $region10: #{glove_embedding_forward.1} parent=1 // pred_check
      _
    $region11: #{glove_embedding_forward.1} parent=1 // pred_check_branch
      %31 = sbr.rel (0) target = $region13
    $region12: #{glove_embedding_forward.1} parent=1 // pred_region
      %32 = dma.done [#allocation7], 2048
    $region13: #{glove_embedding_forward.1} parent=1 // pred_fallthru
      _
    %s33 = smul.u32 0, 24
    loop: start=0, step=1, limit=24
    $region14: #{glove_embedding_forward.1} parent=1 // loop_pre_header
      _
    $region15: #{glove_embedding_forward.1} parent=1 // loop_header
      %s35 = sphi 0, %s39
      %p36 = scmp.ge.s32.totalorder %s35, 24
    $region16: #{glove_embedding_forward.1} parent=1 // loop_header_branch
      %38 = sbr.rel (%p36) target = $region20
    $region17: #{glove_embedding_forward.1} parent=1 // loop_body
      %s40 = sadd.s32 %s33, %s35
      %s41 = sld [smem:[#allocation5 + %s40]]
      %s42 = smul.addr %s41, 16
      %s43 = scalar_lea.hbm %s1, %s42
      %s44 = scalar_lea.vmem [#allocation2], %s35
      // Predicated region
      $region21: #{glove_embedding_forward.1} parent=17 // pred_check
        _
      $region22: #{glove_embedding_forward.1} parent=17 // pred_check_branch
        %46 = sbr.rel target = $region24
      $region23: #{glove_embedding_forward.1} parent=17 // pred_region
        %47 = sst [smem:[#allocation10]] [#allocation9]
        %48 = sst [smem:[#allocation11]] [#allocation8]
      $region24: #{glove_embedding_forward.1} parent=17 // pred_fallthru
        _
      %50 = shalt.err (0)
      %s52 = sshll.u32 %s44, 4
      %s53 = int_to_ptr.vmem [resolvable:$true] %s52
      %55 = dma.hbm_to_vmem [thread:$0]  %s43, 16, %s53, [#allocation3]
    $region18: #{glove_embedding_forward.1} parent=1 // loop_footer
      %s39 = sadd.s32 1, %s35
    $region19: #{glove_embedding_forward.1} parent=1 // loop_footer_branch
      %34 = sbr.rel target = $region15
    $region20: #{glove_embedding_forward.1} parent=1 // loop_exit
      _
    loop: start=0, step=1, limit=24
    $region25: #{glove_embedding_forward.1} parent=1 // loop_pre_header
      _
    $region26: #{glove_embedding_forward.1} parent=1 // loop_header
      %s57 = sphi 0, %s61
      %p58 = scmp.ge.s32.totalorder %s57, 24
    $region27: #{glove_embedding_forward.1} parent=1 // loop_header_branch
      %60 = sbr.rel (%p58) target = $region31
    $region28: #{glove_embedding_forward.1} parent=1 // loop_body
      %s62 = smul.u32 1, 1
      %s63 = sshll.u32 %s62, 4
      %64 = dma.done [#allocation3], %s63
    $region29: #{glove_embedding_forward.1} parent=1 // loop_footer
      %s61 = sadd.s32 1, %s57
    $region30: #{glove_embedding_forward.1} parent=1 // loop_footer_branch
      %56 = sbr.rel target = $region26
    $region31: #{glove_embedding_forward.1} parent=1 // loop_exit
      _
    %v65 = vld [vmem:[#allocation2] sm:$0xff]
    %v66 = vld [vmem:[#allocation2 + $0x8] sm:$0xff]
    %v67 = vld [vmem:[#allocation2 + $0x10] sm:$0xff]
    %v68 = vld [vmem:[#allocation6] sm:$0xff]
    %v69 = vld [vmem:[#allocation6 + $0x8] sm:$0xff]
    %v70 = vld [vmem:[#allocation6 + $0x10] sm:$0xff]
    %v71 = vld [vmem:[#allocation6 + $0x18] sm:$0xff]
    %v72 = vld [vmem:[#allocation6 + $0x20] sm:$0xff]
    %v73 = vld [vmem:[#allocation6 + $0x28] sm:$0xff]
    %v74 = vld [vmem:[#allocation6 + $0x30] sm:$0xff]
    %v75 = vld [vmem:[#allocation6 + $0x38] sm:$0xff]
    %v76 = vld [vmem:[#allocation6 + $0x40] sm:$0xff]
    %v77 = vld [vmem:[#allocation6 + $0x48] sm:$0xff]
    %v78 = vld [vmem:[#allocation6 + $0x50] sm:$0xff]
    %v79 = vld [vmem:[#allocation6 + $0x58] sm:$0xff]
    %v80 = vld [vmem:[#allocation6 + $0x60] sm:$0xff]
    %v81 = vld [vmem:[#allocation6 + $0x68] sm:$0xff]
    %v82 = vld [vmem:[#allocation6 + $0x70] sm:$0xff]
    %v83 = vld [vmem:[#allocation6 + $0x78] sm:$0xff]
    %v84 = vld [vmem:[%s3] sm:$0x1]
    %v86 = vlaneseq
    %v87 = vshrl.u32 %v86, 7
    %v88 = vsub.s32 0, %v87
    %v89 = vrot.slane %v84, %v88
    %91 = vmatprep.subr.mxu0 0.0
    %92 = vmatpush1.msra.mxu0 %v68
    %93 = vmatprep.subr.mxu0 0.0
    %94 = vmatpush1.msra.mxu0 %v69
    %95 = vmatprep.subr.mxu0 0.0
    %96 = vmatpush1.msra.mxu0 %v70
    %97 = vmatprep.subr.mxu0 0.0
    %98 = vmatpush1.msra.mxu0 %v71
    %99 = vmatprep.subr.mxu0 0.0
    %100 = vmatpush1.msra.mxu0 %v72
    %101 = vmatprep.subr.mxu0 0.0
    %102 = vmatpush1.msra.mxu0 %v73
    %103 = vmatprep.subr.mxu0 0.0
    %104 = vmatpush1.msra.mxu0 %v74
    %105 = vmatprep.subr.mxu0 0.0
    %106 = vmatpush1.msra.mxu0 %v75
    %107 = vmatprep.subr.mxu0 0.0
    %108 = vmatpush1.msra.mxu0 %v76
    %109 = vmatprep.subr.mxu0 0.0
    %110 = vmatpush1.msra.mxu0 %v77
    %111 = vmatprep.subr.mxu0 0.0
    %112 = vmatpush1.msra.mxu0 %v78
    %113 = vmatprep.subr.mxu0 0.0
    %114 = vmatpush1.msra.mxu0 %v79
    %115 = vmatprep.subr.mxu0 0.0
    %116 = vmatpush1.msra.mxu0 %v80
    %117 = vmatprep.subr.mxu0 0.0
    %118 = vmatpush1.msra.mxu0 %v81
    %119 = vmatprep.subr.mxu0 0.0
    %120 = vmatpush1.msra.mxu0 %v82
    %121 = vmatprep.subr.mxu0 0.0
    %122 = vmatpush1.msra.mxu0 %v83
    %123 = vmatprep.subr.mxu0 0.0
    %124 = vmatpush1.msra.mxu0 0.0
    %125 = vmatprep.subr.mxu0 0.0
    %126 = vmatpush1.msra.mxu0 0.0
    %127 = vmatprep.subr.mxu0 0.0
    %128 = vmatpush1.msra.mxu0 0.0
    %129 = vmatprep.subr.mxu0 0.0
    %130 = vmatpush1.msra.mxu0 0.0
    %131 = vmatprep.subr.mxu0 0.0
    %132 = vmatpush1.msra.mxu0 0.0
    %133 = vmatprep.subr.mxu0 0.0
    %134 = vmatpush1.msra.mxu0 0.0
    %135 = vmatprep.subr.mxu0 0.0
    %136 = vmatpush1.msra.mxu0 0.0
    %137 = vmatprep.subr.mxu0 0.0
    %138 = vmatpush1.msra.mxu0 0.0
    %139 = vmatprep.subr.mxu0 0.0
    %140 = vmatpush1.msra.mxu0 0.0
    %141 = vmatprep.subr.mxu0 0.0
    %142 = vmatpush1.msra.mxu0 0.0
    %143 = vmatprep.subr.mxu0 0.0
    %144 = vmatpush1.msra.mxu0 0.0
    %145 = vmatprep.subr.mxu0 0.0
    %146 = vmatpush1.msra.mxu0 0.0
    %147 = vmatprep.subr.mxu0 0.0
    %148 = vmatpush1.msra.mxu0 0.0
    %149 = vmatprep.subr.mxu0 0.0
    %150 = vmatpush1.msra.mxu0 0.0
    %151 = vmatprep.subr.mxu0 0.0
    %152 = vmatpush1.msra.mxu0 0.0
    %153 = vmatprep.subr.mxu0 0.0
    %154 = vmatpush1.msra.mxu0 0.0
    %155 = vmatprep.mubr.f32.mxu0 0.0
    %156 = vmatmul.mubr.f32.gmra.mrb[0].mxu0 %v65
    %v157 = vpop.f32.mrb[0].mxu0
    %v158 = vadd.f32 %v89, %v157
    %v159 = vpop.f32.mrb[0].mxu0
    %160 = vmatprep.mubr.f32.mxu0 0.0
    %161 = vmatmul.mubr.f32.gmra.mrb[0].mxu0 %v66
    %v162 = vpop.f32.mrb[0].mxu0
    %v163 = vadd.f32 %v89, %v162
    %v164 = vpop.f32.mrb[0].mxu0
    %165 = vmatprep.mubr.f32.mxu0 0.0
    %166 = vmatmul.mubr.f32.gmra.mrb[0].mxu0 %v67
    %v167 = vpop.f32.mrb[0].mxu0
    %v168 = vadd.f32 %v89, %v167
    %v169 = vpop.f32.mrb[0].mxu0
    %170 = vdwg.mxu0
    %171 = vst [vmem:[%s4] sm:$0xff] %v158
    %172 = vst [vmem:[%s4 + $0x8] sm:$0xff] %v163
    %173 = vst [vmem:[%s4 + $0x10] sm:$0xff] %v168
    // Predicated region
    $region32: #{glove_embedding_forward.1} parent=1 // pred_check
      _
    $region33: #{glove_embedding_forward.1} parent=1 // pred_check_branch
      %175 = sbr.rel (0) target = $region35
    $region34: #{glove_embedding_forward.1} parent=1 // pred_region
      _
    $region35: #{glove_embedding_forward.1} parent=1 // pred_fallthru
      _
    // Predicated region
    $region36: #{glove_embedding_forward.1} parent=1 // pred_check
      _
    $region37: #{glove_embedding_forward.1} parent=1 // pred_check_branch
      %177 = sbr.rel (0) target = $region39
    $region38: #{glove_embedding_forward.1} parent=1 // pred_region
      _
    $region39: #{glove_embedding_forward.1} parent=1 // pred_fallthru
      _
    %178 = vsyncpa [#allocation7], 1
  %179 = vsyncmov [#allocation3]
  %s180 = vpop.sfrf %179
  %p181 = scmp.eq.s32.totalorder %s180, 0
  %p182 = pneg %p181
  %184 = shalt.err (%p182)

</llo_original>
